<compile_context>
chip_gen: v6e
topology: v6e:2x2x1
jax: 0.10.0
libtpu: 0.0.40
codegen_flags: <defaults>
</compile_context>

<pallas_src>
import functools

import jax
import jax.numpy as jnp
import numpy as np
from jax import lax
from jax.experimental import pallas as pl
from jax.experimental.pallas import tpu as pltpu

LANE = 128
SUB = 8
MAX_BLOCK_ROWS = 8192    # 8192 x 128 f32 = 4 MiB per input per pipeline buffer
CHUNK_ROWS = 512         # in-kernel compute chunk: keeps VMEM temporaries small

# deterministic "module parameter" (bins given to __init__)
BINS = (-0.5, 0.5, 1.5)


def _round_up(x, m):
    return (x + m - 1) // m * m


def _smooth_l1_bin_kernel(pred_ref, target_ref, acc_ref, *, bins, block_rows,
                          chunk_rows, blocks_per_split, rows_valid,
                          needs_mask):
    """Accumulates cumulative (>= bin-edge) smooth-L1 sums and element counts.

    acc_ref rows (f32, LANE lanes wide), K = len(bins), num_bins = K + 1:
      [0 .. K-1]              sum of smooth-L1 over elements with t >= bins[j]
      [K]                     sum of smooth-L1 over all non-NaN targets
      [num_bins .. num_bins+K-1]  counts for t >= bins[j]
      [num_bins + K]          count of non-NaN targets
    Per-bin sums/counts are recovered by differencing in the JAX glue.
    """
    K = len(bins)
    num_bins = K + 1
    num_full_chunks = block_rows // chunk_rows
    rem_rows = block_rows - num_full_chunks * chunk_rows

    @pl.when(pl.program_id(1) == 0)
    def _init():
        acc_ref[...] = jnp.zeros_like(acc_ref)

    blk = pl.program_id(0) * blocks_per_split + pl.program_id(1)
    blk_row0 = blk * block_rows

    def accumulate(p, t):
        diff = p - t
        absd = jnp.abs(diff)
        # smooth_l1 with beta = 1.0 (PyTorch default)
        sl1 = jnp.where(absd < 1.0, 0.5 * diff * diff, absd - 0.5)
        valid = jnp.logical_not(jnp.isnan(t))
        # One shared ">= edge" compare per bin boundary (NaN fails them all).
        # Keep selects (not mask-multiplies) so NaN smooth-L1 values squash
        # to 0.  Per-row accumulation avoids any sublane repack per step.
        masks = [t >= b for b in bins] + [valid]
        for j, m in enumerate(masks):
            acc_ref[j:j + 1, :] += jnp.sum(
                jnp.where(m, sl1, 0.0), axis=0, keepdims=True)
            acc_ref[num_bins + j:num_bins + j + 1, :] += jnp.sum(
                m.astype(jnp.float32), axis=0, keepdims=True)

    def process(row_off, nrows):
        p = pred_ref[pl.ds(row_off, nrows), :].astype(jnp.float32)
        t = target_ref[pl.ds(row_off, nrows), :].astype(jnp.float32)
        if not needs_mask:
            accumulate(p, t)
            return
        # Branch-gated masking: only chunks extending past the valid rows
        # (i.e. the tail of the final partial block) pay the mask cost.
        chunk_row0 = blk_row0 + row_off
        is_ragged = chunk_row0 + nrows > rows_valid

        @pl.when(jnp.logical_not(is_ragged))
        def _full():
            accumulate(p, t)

        @pl.when(is_ragged)
        def _ragged():
            # Out-of-range rows hold unspecified data; NaN their targets so
            # they fail every comparison and contribute nothing.
            row_ids = chunk_row0 + lax.broadcasted_iota(jnp.int32, t.shape, 0)
            accumulate(p, jnp.where(row_ids < rows_valid, t, jnp.nan))

    if num_full_chunks > 0:
        @pl.loop(0, num_full_chunks)
        def _chunk(ci):
            process(pl.multiple_of(ci * chunk_rows, chunk_rows), chunk_rows)

    if rem_rows > 0:
        # Static remainder sub-chunk (single full-extent block case only).
        process(num_full_chunks * chunk_rows, rem_rows)


def weighted_and_masked_smooth_l1(pred, target, bins=BINS):
    bins = tuple(float(b) for b in bins)
    K = len(bins)
    num_bins = K + 1
    acc_rows = _round_up(2 * num_bins, SUB)

    p = pred.reshape(-1)
    t = target.reshape(-1)
    n = p.shape[0]
    rows = n // LANE
    rem = n - rows * LANE

    bin_sum = jnp.zeros((num_bins,), jnp.float32)
    bin_cnt = jnp.zeros((num_bins,), jnp.float32)

    if rows > 0:
        # Lane-aligned prefix streams straight through the kernel; no padded
        # full-array copy is ever materialized.
        p2 = p[:rows * LANE].reshape(rows, LANE)
        t2 = t[:rows * LANE].reshape(rows, LANE)

        if rows <= MAX_BLOCK_ROWS:
            block_rows = rows            # full-extent block: always legal
        else:
            block_rows = MAX_BLOCK_ROWS  # multiple of CHUNK_ROWS (and of 8)
        total_blocks = pl.cdiv(rows, block_rows)
        needs_mask = total_blocks * block_rows != rows

        # Optional 2-way split of the reduction for megacore; harmless on
        # single-TensorCore chips.  TODO(synk): use CORE_PARALLEL / core_map
        # (gated on the real core count) to guarantee cross-core sharding on
        # v7x and drop the even-block-count requirement.
        num_splits = 2 if (total_blocks >= 2 and total_blocks % 2 == 0) else 1
        blocks_per_split = total_blocks // num_splits

        kernel = functools.partial(
            _smooth_l1_bin_kernel, bins=bins, block_rows=block_rows,
            chunk_rows=CHUNK_ROWS, blocks_per_split=blocks_per_split,
            rows_valid=rows, needs_mask=needs_mask)

        acc = pl.pallas_call(
            kernel,
            out_shape=jax.ShapeDtypeStruct((num_splits * acc_rows, LANE),
                                           jnp.float32),
            grid=(num_splits, blocks_per_split),
            in_specs=[
                pl.BlockSpec((block_rows, LANE),
                             lambda c, i: (c * blocks_per_split + i, 0)),
                pl.BlockSpec((block_rows, LANE),
                             lambda c, i: (c * blocks_per_split + i, 0)),
            ],
            out_specs=pl.BlockSpec((acc_rows, LANE), lambda c, i: (c, 0)),
            compiler_params=pltpu.CompilerParams(
                dimension_semantics=("parallel", "arbitrary"),
                vmem_limit_bytes=32 * 1024 * 1024),
        )(p2, t2)

        # tiny glue: merge splits, lane-reduce, cumulative -> per-bin totals.
        acc = acc.reshape(num_splits, acc_rows, LANE).sum(axis=0)
        lane_sum = jnp.sum(acc, axis=1)                       # (acc_rows,)
        s_ge, s_valid = lane_sum[:K], lane_sum[K]
        c_ge, c_valid = lane_sum[num_bins:num_bins + K], lane_sum[num_bins + K]
        bin_sum = jnp.concatenate(
            [jnp.reshape(s_valid - s_ge[0], (1,)),
             s_ge[:-1] - s_ge[1:], s_ge[-1:]])
        bin_cnt = jnp.concatenate(
            [jnp.reshape(c_valid - c_ge[0], (1,)),
             c_ge[:-1] - c_ge[1:], c_ge[-1:]])

    if rem > 0:
        # The < 128-element lane-ragged tail is folded in with plain JAX ops
        # instead of a padded copy of the full inputs.
        pt = p[rows * LANE:].astype(jnp.float32)
        tt = t[rows * LANE:].astype(jnp.float32)
        d = pt - tt
        a = jnp.abs(d)
        sl1 = jnp.where(a < 1.0, 0.5 * d * d, a - 0.5)
        tail_sums, tail_cnts = [], []
        for b in range(num_bins):
            if b == 0:
                m = tt < bins[0]
            elif b == num_bins - 1:
                m = tt >= bins[-1]
            else:
                m = jnp.logical_and(tt >= bins[b - 1], tt < bins[b])
            tail_sums.append(jnp.sum(jnp.where(m, sl1, 0.0)))
            tail_cnts.append(jnp.sum(m.astype(jnp.float32)))
        bin_sum = bin_sum + jnp.stack(tail_sums)
        bin_cnt = bin_cnt + jnp.stack(tail_cnts)

    has_elems = bin_cnt > 0
    bin_mean = jnp.where(has_elems, bin_sum / jnp.maximum(bin_cnt, 1.0), 0.0)
    # NOTE: if every bin is empty this yields NaN (reference would raise on an
    # empty stack); counts are exact in f32 up to 2^24 elements per lane.
    return jnp.sum(bin_mean) / jnp.sum(has_elems.astype(jnp.float32))


def _reference(pred, target, bins=BINS):
    """Pure NumPy re-implementation of the PyTorch forward for verification."""
    p = np.asarray(pred, dtype=np.float32).reshape(-1)
    t = np.asarray(target, dtype=np.float32).reshape(-1)
    nan_mask = ~np.isnan(t)
    num_bins = len(bins) + 1
    losses = []
    for b in range(num_bins):
        if b == 0:
            in_bin = t < bins[0]
        elif b == num_bins - 1:
            in_bin = t >= bins[-1]
        else:
            in_bin = (t >= bins[b - 1]) & (t < bins[b])
        m = nan_mask & in_bin
        if m.sum() > 0:
            d = p[m] - t[m]
            a = np.abs(d)
            sl1 = np.where(a < 1.0, 0.5 * d * d, a - 0.5)
            losses.append(sl1.mean())
    return np.mean(np.stack(losses))


if __name__ == "__main__":
    key = jax.random.PRNGKey(0)

    def make_case(case_key, shape, nan_frac=0.05):
        k1, k2, k3 = jax.random.split(case_key, 3)
        pred = jax.random.normal(k1, shape, dtype=jnp.float32)
        target = jax.random.normal(k2, shape, dtype=jnp.float32) * 1.5
        nan_sites = jax.random.uniform(k3, shape) < nan_frac
        target = jnp.where(nan_sites, jnp.nan, target)
        return pred, target

    k_a, k_b, k_c, k_d = jax.random.split(key, 4)

    # Primary case from the module spec: NCHW = (2, 4, 16, 16).
    pred, target = make_case(k_a, (2, 4, 16, 16))
    out = jax.block_until_ready(weighted_and_masked_smooth_l1(pred, target, BINS))
    ref = _reference(np.asarray(pred), np.asarray(target), BINS)
    np.testing.assert_allclose(np.asarray(out), ref, rtol=1e-5, atol=1e-6)

    # Single full-extent block: in-kernel chunk loop + static remainder chunk.
    pred, target = make_case(k_b, (2, 4, 132, 132))
    out = jax.block_until_ready(weighted_and_masked_smooth_l1(pred, target, BINS))
    ref = _reference(np.asarray(pred), np.asarray(target), BINS)
    np.testing.assert_allclose(np.asarray(out), ref, rtol=1e-4, atol=1e-6)

    # Lane-ragged (n % 128 != 0) tail handled in the JAX glue.
    pred, target = make_case(k_c, (3, 5, 7))
    out = jax.block_until_ready(weighted_and_masked_smooth_l1(pred, target, BINS))
    ref = _reference(np.asarray(pred), np.asarray(target), BINS)
    np.testing.assert_allclose(np.asarray(out), ref, rtol=1e-5, atol=1e-6)

    # Multi-block case: 2-way split + ragged final block (masked chunks only).
    pred, target = make_case(k_d, (2, 4, 256, 513))
    out = jax.block_until_ready(weighted_and_masked_smooth_l1(pred, target, BINS))
    ref = _reference(np.asarray(pred), np.asarray(target), BINS)
    np.testing.assert_allclose(np.asarray(out), ref, rtol=1e-4, atol=1e-6)

    print("KERNEL_OK")
</pallas_src>

<mosaic_0001>
module attributes {stable_mosaic.version = 11 : i64} {
  func.func @_smooth_l1_bin_kernel(%arg0: i32, %arg1: i32, %arg2: memref<16x128xf32, #tpu.memory_space<vmem>>, %arg3: memref<16x128xf32, #tpu.memory_space<vmem>>, %arg4: memref<8x128xf32, #tpu.memory_space<vmem>>) attributes {dimension_semantics = [#tpu.dimension_semantics<parallel>, #tpu.dimension_semantics<arbitrary>], iteration_bounds = array<i64: 1, 1>, scalar_prefetch = 0 : i64, scratch_operands = 0 : i64, tpu.core_type = #tpu.core_type<tc>, window_params = [{transform_indices = @transform_0, window_bounds = array<i64: 16, 128>}, {transform_indices = @transform_1, window_bounds = array<i64: 16, 128>}, {transform_indices = @transform_2, window_bounds = array<i64: 8, 128>}]} {
    %c0_i32 = arith.constant 0 : i32
    %0 = arith.cmpi eq, %arg1, %c0_i32 : i32
    %1 = arith.extui %0 : i1 to i32
    %c0_i32_0 = arith.constant 0 : i32
    %2 = arith.cmpi ne, %1, %c0_i32_0 : i32
    scf.if %2 {
      %cst_47 = arith.constant 0.000000e+00 : f32
      %79 = vector.broadcast %cst_47 : f32 to vector<8x128xf32>
      %c0_48 = arith.constant 0 : index
      %c0_49 = arith.constant 0 : index
      %80 = vector.load %arg4[%c0_48, %c0_49] : memref<8x128xf32, #tpu.memory_space<vmem>>, vector<8x128xf32>
      tpu.vector_store %arg4[%c0_48, %c0_49], %79 {strides = array<i32>} : memref<8x128xf32, #tpu.memory_space<vmem>>, vector<8x128xf32>,
    } else {
    }
    %c0 = arith.constant 0 : index
    %c0_1 = arith.constant 0 : index
    %3 = vector.load %arg2[%c0, %c0_1] : memref<16x128xf32, #tpu.memory_space<vmem>>, vector<16x128xf32>
    %c0_2 = arith.constant 0 : index
    %c0_3 = arith.constant 0 : index
    %4 = vector.load %arg3[%c0_2, %c0_3] : memref<16x128xf32, #tpu.memory_space<vmem>>, vector<16x128xf32>
    %5 = arith.subf %3, %4 : vector<16x128xf32>
    %6 = math.absf %5 : vector<16x128xf32>
    %cst = arith.constant 1.000000e+00 : f32
    %7 = vector.broadcast %cst : f32 to vector<16x128xf32>
    %8 = arith.cmpf olt, %6, %7 : vector<16x128xf32>
    %cst_4 = arith.constant 5.000000e-01 : f32
    %9 = vector.broadcast %cst_4 : f32 to vector<16x128xf32>
    %10 = arith.mulf %9, %5 : vector<16x128xf32>
    %11 = arith.mulf %10, %5 : vector<16x128xf32>
    %cst_5 = arith.constant 5.000000e-01 : f32
    %12 = vector.broadcast %cst_5 : f32 to vector<16x128xf32>
    %13 = arith.subf %6, %12 : vector<16x128xf32>
    %14 = arith.select %8, %11, %13 : vector<16x128xi1>, vector<16x128xf32>
    %15 = arith.cmpf one, %4, %4 : vector<16x128xf32>
    %cst_6 = arith.constant dense<true> : vector<16x128xi1>
    %16 = arith.xori %15, %cst_6 : vector<16x128xi1>
    %cst_7 = arith.constant -5.000000e-01 : f32
    %17 = vector.broadcast %cst_7 : f32 to vector<16x128xf32>
    %18 = arith.cmpf oge, %4, %17 : vector<16x128xf32>
    %cst_8 = arith.constant 5.000000e-01 : f32
    %19 = vector.broadcast %cst_8 : f32 to vector<16x128xf32>
    %20 = arith.cmpf oge, %4, %19 : vector<16x128xf32>
    %cst_9 = arith.constant 1.500000e+00 : f32
    %21 = vector.broadcast %cst_9 : f32 to vector<16x128xf32>
    %22 = arith.cmpf oge, %4, %21 : vector<16x128xf32>
    %c0_10 = arith.constant 0 : index
    %c0_11 = arith.constant 0 : index
    %23 = vector.load %arg4[%c0_10, %c0_11] : memref<8x128xf32, #tpu.memory_space<vmem>>, vector<1x128xf32>
    %cst_12 = arith.constant 0.000000e+00 : f32
    %24 = vector.broadcast %cst_12 : f32 to vector<16x128xf32>
    %25 = arith.select %18, %14, %24 : vector<16x128xi1>, vector<16x128xf32>
    %cst_13 = arith.constant dense<0.000000e+00> : vector<128xf32>
    %26 = vector.multi_reduction <add>, %25, %cst_13 [0] : vector<16x128xf32> to vector<128xf32>
    %27 = vector.shape_cast %26 : vector<128xf32> to vector<1x128xf32>
    %28 = arith.addf %23, %27 : vector<1x128xf32>
    %c0_14 = arith.constant 0 : index
    %c0_15 = arith.constant 0 : index
    %29 = vector.load %arg4[%c0_14, %c0_15] : memref<8x128xf32, #tpu.memory_space<vmem>>, vector<1x128xf32>
    tpu.vector_store %arg4[%c0_14, %c0_15], %28 {strides = array<i32>} : memref<8x128xf32, #tpu.memory_space<vmem>>, vector<1x128xf32>,
    %c4 = arith.constant 4 : index
    %c0_16 = arith.constant 0 : index
    %30 = vector.load %arg4[%c4, %c0_16] : memref<8x128xf32, #tpu.memory_space<vmem>>, vector<1x128xf32>
    %31 = arith.extui %18 : vector<16x128xi1> to vector<16x128xi32>
    %32 = arith.sitofp %31 : vector<16x128xi32> to vector<16x128xf32>
    %cst_17 = arith.constant dense<0.000000e+00> : vector<128xf32>
    %33 = vector.multi_reduction <add>, %32, %cst_17 [0] : vector<16x128xf32> to vector<128xf32>
    %34 = vector.shape_cast %33 : vector<128xf32> to vector<1x128xf32>
    %35 = arith.addf %30, %34 : vector<1x128xf32>
    %c4_18 = arith.constant 4 : index
    %c0_19 = arith.constant 0 : index
    %36 = vector.load %arg4[%c4_18, %c0_19] : memref<8x128xf32, #tpu.memory_space<vmem>>, vector<1x128xf32>
    tpu.vector_store %arg4[%c4_18, %c0_19], %35 {strides = array<i32>} : memref<8x128xf32, #tpu.memory_space<vmem>>, vector<1x128xf32>,
    %c1 = arith.constant 1 : index
    %c0_20 = arith.constant 0 : index
    %37 = vector.load %arg4[%c1, %c0_20] : memref<8x128xf32, #tpu.memory_space<vmem>>, vector<1x128xf32>
    %cst_21 = arith.constant 0.000000e+00 : f32
    %38 = vector.broadcast %cst_21 : f32 to vector<16x128xf32>
    %39 = arith.select %20, %14, %38 : vector<16x128xi1>, vector<16x128xf32>
    %cst_22 = arith.constant dense<0.000000e+00> : vector<128xf32>
    %40 = vector.multi_reduction <add>, %39, %cst_22 [0] : vector<16x128xf32> to vector<128xf32>
    %41 = vector.shape_cast %40 : vector<128xf32> to vector<1x128xf32>
    %42 = arith.addf %37, %41 : vector<1x128xf32>
    %c1_23 = arith.constant 1 : index
    %c0_24 = arith.constant 0 : index
    %43 = vector.load %arg4[%c1_23, %c0_24] : memref<8x128xf32, #tpu.memory_space<vmem>>, vector<1x128xf32>
    tpu.vector_store %arg4[%c1_23, %c0_24], %42 {strides = array<i32>} : memref<8x128xf32, #tpu.memory_space<vmem>>, vector<1x128xf32>,
    %c5 = arith.constant 5 : index
    %c0_25 = arith.constant 0 : index
    %44 = vector.load %arg4[%c5, %c0_25] : memref<8x128xf32, #tpu.memory_space<vmem>>, vector<1x128xf32>
    %45 = arith.extui %20 : vector<16x128xi1> to vector<16x128xi32>
    %46 = arith.sitofp %45 : vector<16x128xi32> to vector<16x128xf32>
    %cst_26 = arith.constant dense<0.000000e+00> : vector<128xf32>
    %47 = vector.multi_reduction <add>, %46, %cst_26 [0] : vector<16x128xf32> to vector<128xf32>
    %48 = vector.shape_cast %47 : vector<128xf32> to vector<1x128xf32>
    %49 = arith.addf %44, %48 : vector<1x128xf32>
    %c5_27 = arith.constant 5 : index
    %c0_28 = arith.constant 0 : index
    %50 = vector.load %arg4[%c5_27, %c0_28] : memref<8x128xf32, #tpu.memory_space<vmem>>, vector<1x128xf32>
    tpu.vector_store %arg4[%c5_27, %c0_28], %49 {strides = array<i32>} : memref<8x128xf32, #tpu.memory_space<vmem>>, vector<1x128xf32>,
    %c2 = arith.constant 2 : index
    %c0_29 = arith.constant 0 : index
    %51 = vector.load %arg4[%c2, %c0_29] : memref<8x128xf32, #tpu.memory_space<vmem>>, vector<1x128xf32>
    %cst_30 = arith.constant 0.000000e+00 : f32
    %52 = vector.broadcast %cst_30 : f32 to vector<16x128xf32>
    %53 = arith.select %22, %14, %52 : vector<16x128xi1>, vector<16x128xf32>
    %cst_31 = arith.constant dense<0.000000e+00> : vector<128xf32>
    %54 = vector.multi_reduction <add>, %53, %cst_31 [0] : vector<16x128xf32> to vector<128xf32>
    %55 = vector.shape_cast %54 : vector<128xf32> to vector<1x128xf32>
    %56 = arith.addf %51, %55 : vector<1x128xf32>
    %c2_32 = arith.constant 2 : index
    %c0_33 = arith.constant 0 : index
    %57 = vector.load %arg4[%c2_32, %c0_33] : memref<8x128xf32, #tpu.memory_space<vmem>>, vector<1x128xf32>
    tpu.vector_store %arg4[%c2_32, %c0_33], %56 {strides = array<i32>} : memref<8x128xf32, #tpu.memory_space<vmem>>, vector<1x128xf32>,
    %c6 = arith.constant 6 : index
    %c0_34 = arith.constant 0 : index
    %58 = vector.load %arg4[%c6, %c0_34] : memref<8x128xf32, #tpu.memory_space<vmem>>, vector<1x128xf32>
    %59 = arith.extui %22 : vector<16x128xi1> to vector<16x128xi32>
    %60 = arith.sitofp %59 : vector<16x128xi32> to vector<16x128xf32>
    %cst_35 = arith.constant dense<0.000000e+00> : vector<128xf32>
    %61 = vector.multi_reduction <add>, %60, %cst_35 [0] : vector<16x128xf32> to vector<128xf32>
    %62 = vector.shape_cast %61 : vector<128xf32> to vector<1x128xf32>
    %63 = arith.addf %58, %62 : vector<1x128xf32>
    %c6_36 = arith.constant 6 : index
    %c0_37 = arith.constant 0 : index
    %64 = vector.load %arg4[%c6_36, %c0_37] : memref<8x128xf32, #tpu.memory_space<vmem>>, vector<1x128xf32>
    tpu.vector_store %arg4[%c6_36, %c0_37], %63 {strides = array<i32>} : memref<8x128xf32, #tpu.memory_space<vmem>>, vector<1x128xf32>,
    %c3 = arith.constant 3 : index
    %c0_38 = arith.constant 0 : index
    %65 = vector.load %arg4[%c3, %c0_38] : memref<8x128xf32, #tpu.memory_space<vmem>>, vector<1x128xf32>
    %cst_39 = arith.constant 0.000000e+00 : f32
    %66 = vector.broadcast %cst_39 : f32 to vector<16x128xf32>
    %67 = arith.select %16, %14, %66 : vector<16x128xi1>, vector<16x128xf32>
    %cst_40 = arith.constant dense<0.000000e+00> : vector<128xf32>
    %68 = vector.multi_reduction <add>, %67, %cst_40 [0] : vector<16x128xf32> to vector<128xf32>
    %69 = vector.shape_cast %68 : vector<128xf32> to vector<1x128xf32>
    %70 = arith.addf %65, %69 : vector<1x128xf32>
    %c3_41 = arith.constant 3 : index
    %c0_42 = arith.constant 0 : index
    %71 = vector.load %arg4[%c3_41, %c0_42] : memref<8x128xf32, #tpu.memory_space<vmem>>, vector<1x128xf32>
    tpu.vector_store %arg4[%c3_41, %c0_42], %70 {strides = array<i32>} : memref<8x128xf32, #tpu.memory_space<vmem>>, vector<1x128xf32>,
    %c7 = arith.constant 7 : index
    %c0_43 = arith.constant 0 : index
    %72 = vector.load %arg4[%c7, %c0_43] : memref<8x128xf32, #tpu.memory_space<vmem>>, vector<1x128xf32>
    %73 = arith.extui %16 : vector<16x128xi1> to vector<16x128xi32>
    %74 = arith.sitofp %73 : vector<16x128xi32> to vector<16x128xf32>
    %cst_44 = arith.constant dense<0.000000e+00> : vector<128xf32>
    %75 = vector.multi_reduction <add>, %74, %cst_44 [0] : vector<16x128xf32> to vector<128xf32>
    %76 = vector.shape_cast %75 : vector<128xf32> to vector<1x128xf32>
    %77 = arith.addf %72, %76 : vector<1x128xf32>
    %c7_45 = arith.constant 7 : index
    %c0_46 = arith.constant 0 : index
    %78 = vector.load %arg4[%c7_45, %c0_46] : memref<8x128xf32, #tpu.memory_space<vmem>>, vector<1x128xf32>
    tpu.vector_store %arg4[%c7_45, %c0_46], %77 {strides = array<i32>} : memref<8x128xf32, #tpu.memory_space<vmem>>, vector<1x128xf32>,
    return
  }
  func.func @transform_0(%arg0: i32, %arg1: i32) -> (i32, i32) {
    %c1_i32 = arith.constant 1 : i32
    %0 = arith.muli %arg0, %c1_i32 : i32
    %1 = arith.addi %0, %arg1 : i32
    %c0_i32 = arith.constant 0 : i32
    %c0_i32_0 = arith.constant 0 : i32
    return %1, %c0_i32 : i32, i32
  }
  func.func @transform_1(%arg0: i32, %arg1: i32) -> (i32, i32) {
    %c1_i32 = arith.constant 1 : i32
    %0 = arith.muli %arg0, %c1_i32 : i32
    %1 = arith.addi %0, %arg1 : i32
    %c0_i32 = arith.constant 0 : i32
    %c0_i32_0 = arith.constant 0 : i32
    return %1, %c0_i32 : i32, i32
  }
  func.func @transform_2(%arg0: i32, %arg1: i32) -> (i32, i32) {
    %c0_i32 = arith.constant 0 : i32
    %c0_i32_0 = arith.constant 0 : i32
    return %arg0, %c0_i32 : i32, i32
  }
}

</mosaic_0001>

<llo_original>
// kernel: tpu_custom_call.1
$region0: #{tpu_custom_call.1}
  #allocation0 [shape = 'u32[]', space=smem, size = 0x4, offset = 0x4, fixed_abs, tag = 'smem constant byte address 0x4 - core index']
  #allocation1 [shape = 'u32[144,128]{1,0:T(1,128)}', space=vmem, size = 0x12000, scoped, tag = 'internal scratch']
  %s0 = inlined_call_operand.hbm [shape: f32[16,128], index: 0, kind: input, shape index: {}]
  %s1 = inlined_call_operand.hbm [shape: f32[16,128], index: 1, kind: input, shape index: {}]
  %s2 = inlined_call_operand.hbm [shape: f32[8,128], index: 2, kind: output, shape index: {}]
  %s3 = sld [smem:[#allocation0]]
  $region30: #{tpu_custom_call.1} parent=0
    _
  %s5 = ssub.s32 1, %s3
  %s6 = scalar_select 0, %s5, %s3
  $region1: #{tpu_custom_call.1} parent=0
    #allocation2 [shape = 'u8[8192]{0}', space=vmem, size = 0x2000, scoped, tag = 'input window, operand 0, single buffered']
    #allocation3 [shape = 's32[1]{0}', space=sflag, size = 0x4, scoped, tag = 'scoped memory for tpu_custom_call.1']
    #allocation4 [shape = 's32[1]{0}', space=sflag, size = 0x4, scoped, tag = 'scoped memory for tpu_custom_call.1']
    #allocation5 [shape = 'u8[8192]{0}', space=vmem, size = 0x2000, scoped, tag = 'input window, operand 1, single buffered']
    #allocation6 [shape = 's32[1]{0}', space=sflag, size = 0x4, scoped, tag = 'scoped memory for tpu_custom_call.1']
    #allocation7 [shape = 'u8[4096]{0}', space=vmem, size = 0x1000, scoped, tag = 'output window, operand 0, single buffered']
    %7 = vsyncpa [#allocation3], 0
    %8 = vsyncpa [#allocation6], 0
    %9 = vsyncpa [#allocation4], 0
    // Predicated region
    $region2: #{tpu_custom_call.1} parent=1 // pred_check
      _
    $region3: #{tpu_custom_call.1} parent=1 // pred_check_branch
      %11 = sbr.rel (0) target = $region5
    $region4: #{tpu_custom_call.1} parent=1 // pred_region
      %s12 = sadd.s32 0, 0
      %s13 = smul.u32 2, %s12
      %s15 = ssub.s32 256, 256
      %16 = vsyncadd [#allocation3], %s15
      %s17 = smul.addr %s13, 128
      %s18 = scalar_lea.hbm %s0, %s17
      %s19 = sshll.u32 [#allocation2], 4
      %s20 = int_to_ptr.vmem [resolvable:$true] %s19
      %25 = dma.hbm_to_vmem [thread:$0]  %s18, 256, %s20, [#allocation3], 128, 128, 8
    $region5: #{tpu_custom_call.1} parent=1 // pred_fallthru
      _
    // Predicated region
    $region6: #{tpu_custom_call.1} parent=1 // pred_check
      _
    $region7: #{tpu_custom_call.1} parent=1 // pred_check_branch
      %27 = sbr.rel (0) target = $region9
    $region8: #{tpu_custom_call.1} parent=1 // pred_region
      %s28 = sadd.s32 0, 0
      %s29 = smul.u32 2, %s28
      %s31 = ssub.s32 256, 256
      %32 = vsyncadd [#allocation6], %s31
      %s33 = smul.addr %s29, 128
      %s34 = scalar_lea.hbm %s1, %s33
      %s35 = sshll.u32 [#allocation5], 4
      %s36 = int_to_ptr.vmem [resolvable:$true] %s35
      %41 = dma.hbm_to_vmem [thread:$0]  %s34, 256, %s36, [#allocation6], 128, 128, 8
    $region9: #{tpu_custom_call.1} parent=1 // pred_fallthru
      _
    // Predicated region
    $region10: #{tpu_custom_call.1} parent=1 // pred_check
      _
    $region11: #{tpu_custom_call.1} parent=1 // pred_check_branch
      %43 = sbr.rel (0) target = $region13
    $region12: #{tpu_custom_call.1} parent=1 // pred_region
      %44 = dma.done [#allocation3], 256
    $region13: #{tpu_custom_call.1} parent=1 // pred_fallthru
      _
    // Predicated region
    $region14: #{tpu_custom_call.1} parent=1 // pred_check
      _
    $region15: #{tpu_custom_call.1} parent=1 // pred_check_branch
      %46 = sbr.rel (0) target = $region17
    $region16: #{tpu_custom_call.1} parent=1 // pred_region
      %47 = dma.done [#allocation6], 256
    $region17: #{tpu_custom_call.1} parent=1 // pred_fallthru
      _
    %s48 = sadd.s32 0, 0
    %s49 = smul.u32 2, %s48
    %s50 = sadd.s32 0, 0
    %s51 = smul.u32 2, %s50
    %p52 = scmp.eq.s32.totalorder 0, 0
    // Predicated region
    $region18: #{tpu_custom_call.1} parent=1 // pred_check
      %p53 = pneg %p52
    $region19: #{tpu_custom_call.1} parent=1 // pred_check_branch
      %55 = sbr.rel (%p53) target = $region21
    $region20: #{tpu_custom_call.1} parent=1 // pred_region
      %56 = vst [vmem:[#allocation7] sm:$0xff] 0.0
    $region21: #{tpu_custom_call.1} parent=1 // pred_fallthru
      _
    %v57 = vld [vmem:[#allocation2] sm:$0xff]
    %v58 = vld [vmem:[#allocation2 + $0x8] sm:$0xff]
    %v59 = vld [vmem:[#allocation5] sm:$0xff]
    %v60 = vld [vmem:[#allocation5 + $0x8] sm:$0xff]
    %v61 = vsub.f32 %v57, %v59
    %v62 = vsub.f32 %v58, %v60
    %v63 = vand.u32 2147483647, %v61
    %v64 = vand.u32 2147483647, %v62
    %vm65 = vcmp.lt.f32.partialorder %v63, 1.0
    %vm66 = vcmp.lt.f32.partialorder %v64, 1.0
    %v67 = vmul.f32 %v61, 0.5
    %v68 = vmul.f32 %v62, 0.5
    %v69 = vmul.f32 %v67, %v61
    %v70 = vmul.f32 %v68, %v62
    %v71 = vsub.f32 %v63, 0.5
    %v72 = vsub.f32 %v64, 0.5
    %v73 = vsel %vm65, %v69, %v71
    %v74 = vsel %vm66, %v70, %v72
    %vm75 = vcmp.ne.f32.partialorder %v59, %v59
    %vm76 = vcmp.ne.f32.partialorder %v60, %v60
    %vm77 = vmxor %vm75, 1
    %vm78 = vmxor %vm76, 1
    %vm79 = vcmp.ge.f32.partialorder %v59, -0.5
    %vm80 = vcmp.ge.f32.partialorder %v60, -0.5
    %vm81 = vcmp.ge.f32.partialorder %v59, 0.5
    %vm82 = vcmp.ge.f32.partialorder %v60, 0.5
    %vm83 = vcmp.ge.f32.partialorder %v59, 1.5
    %vm84 = vcmp.ge.f32.partialorder %v60, 1.5
    %v85 = vld [vmem:[#allocation7] sm:$0x1]
    %v86 = vsel %vm79, %v73, 0.0
    %v87 = vsel %vm80, %v74, 0.0
    %v88 = vadd.f32 %v86, %v87
    %v89 = vrot.slane %v88, 4
    %v90 = vadd.f32 %v88, %v89
    %v91 = vrot.slane %v90, 2
    %v92 = vadd.f32 %v90, %v91
    %v93 = vrot.slane %v92, 1
    %v94 = vadd.f32 %v92, %v93
    %v95 = vadd.f32 %v85, %v94
    %96 = vst [vmem:[#allocation7] sm:$0x1] %v95
    %v97 = vld [vmem:[#allocation7 + $0x4] sm:$0x1]
    %v98 = vsel %vm79, 1, 0
    %v99 = vsel %vm80, 1, 0
    %v100 = vcvt.s32.f32 %v98
    %v101 = vcvt.s32.f32 %v99
    %v102 = vadd.f32 %v100, %v101
    %v103 = vrot.slane %v102, 4
    %v104 = vadd.f32 %v102, %v103
    %v105 = vrot.slane %v104, 2
    %v106 = vadd.f32 %v104, %v105
    %v107 = vrot.slane %v106, 1
    %v108 = vadd.f32 %v106, %v107
    %v109 = vadd.f32 %v97, %v108
    %110 = vst [vmem:[#allocation7 + $0x4] sm:$0x1] %v109
    %v111 = vld [vmem:[#allocation7 + $0x1] sm:$0x1]
    %v112 = vsel %vm81, %v73, 0.0
    %v113 = vsel %vm82, %v74, 0.0
    %v114 = vadd.f32 %v112, %v113
    %v115 = vrot.slane %v114, 4
    %v116 = vadd.f32 %v114, %v115
    %v117 = vrot.slane %v116, 2
    %v118 = vadd.f32 %v116, %v117
    %v119 = vrot.slane %v118, 1
    %v120 = vadd.f32 %v118, %v119
    %v121 = vadd.f32 %v111, %v120
    %122 = vst [vmem:[#allocation7 + $0x1] sm:$0x1] %v121
    %v123 = vld [vmem:[#allocation7 + $0x5] sm:$0x1]
    %v124 = vsel %vm81, 1, 0
    %v125 = vsel %vm82, 1, 0
    %v126 = vcvt.s32.f32 %v124
    %v127 = vcvt.s32.f32 %v125
    %v128 = vadd.f32 %v126, %v127
    %v129 = vrot.slane %v128, 4
    %v130 = vadd.f32 %v128, %v129
    %v131 = vrot.slane %v130, 2
    %v132 = vadd.f32 %v130, %v131
    %v133 = vrot.slane %v132, 1
    %v134 = vadd.f32 %v132, %v133
    %v135 = vadd.f32 %v123, %v134
    %136 = vst [vmem:[#allocation7 + $0x5] sm:$0x1] %v135
    %v137 = vld [vmem:[#allocation7 + $0x2] sm:$0x1]
    %v138 = vsel %vm83, %v73, 0.0
    %v139 = vsel %vm84, %v74, 0.0
    %v140 = vadd.f32 %v138, %v139
    %v141 = vrot.slane %v140, 4
    %v142 = vadd.f32 %v140, %v141
    %v143 = vrot.slane %v142, 2
    %v144 = vadd.f32 %v142, %v143
    %v145 = vrot.slane %v144, 1
    %v146 = vadd.f32 %v144, %v145
    %v147 = vadd.f32 %v137, %v146
    %148 = vst [vmem:[#allocation7 + $0x2] sm:$0x1] %v147
    %v149 = vld [vmem:[#allocation7 + $0x6] sm:$0x1]
    %v150 = vsel %vm83, 1, 0
    %v151 = vsel %vm84, 1, 0
    %v152 = vcvt.s32.f32 %v150
    %v153 = vcvt.s32.f32 %v151
    %v154 = vadd.f32 %v152, %v153
    %v155 = vrot.slane %v154, 4
    %v156 = vadd.f32 %v154, %v155
    %v157 = vrot.slane %v156, 2
    %v158 = vadd.f32 %v156, %v157
    %v159 = vrot.slane %v158, 1
    %v160 = vadd.f32 %v158, %v159
    %v161 = vadd.f32 %v149, %v160
    %162 = vst [vmem:[#allocation7 + $0x6] sm:$0x1] %v161
    %v163 = vld [vmem:[#allocation7 + $0x3] sm:$0x1]
    %v164 = vsel %vm77, %v73, 0.0
    %v165 = vsel %vm78, %v74, 0.0
    %v166 = vadd.f32 %v164, %v165
    %v167 = vrot.slane %v166, 4
    %v168 = vadd.f32 %v166, %v167
    %v169 = vrot.slane %v168, 2
    %v170 = vadd.f32 %v168, %v169
    %v171 = vrot.slane %v170, 1
    %v172 = vadd.f32 %v170, %v171
    %v173 = vadd.f32 %v163, %v172
    %174 = vst [vmem:[#allocation7 + $0x3] sm:$0x1] %v173
    %v175 = vld [vmem:[#allocation7 + $0x7] sm:$0x1]
    %v176 = vsel %vm77, 1, 0
    %v177 = vsel %vm78, 1, 0
    %v178 = vcvt.s32.f32 %v176
    %v179 = vcvt.s32.f32 %v177
    %v180 = vadd.f32 %v178, %v179
    %v181 = vrot.slane %v180, 4
    %v182 = vadd.f32 %v180, %v181
    %v183 = vrot.slane %v182, 2
    %v184 = vadd.f32 %v182, %v183
    %v185 = vrot.slane %v184, 1
    %v186 = vadd.f32 %v184, %v185
    %v187 = vadd.f32 %v175, %v186
    %188 = vst [vmem:[#allocation7 + $0x7] sm:$0x1] %v187
    // Predicated region
    $region22: #{tpu_custom_call.1} parent=1 // pred_check
      _
    $region23: #{tpu_custom_call.1} parent=1 // pred_check_branch
      %190 = sbr.rel (0) target = $region25
    $region24: #{tpu_custom_call.1} parent=1 // pred_region
      %s192 = ssub.s32 128, 128
      %193 = vsyncadd [#allocation4], %s192
      %s195 = sshll.u32 [#allocation7], 4
      %s196 = int_to_ptr.vmem [resolvable:$true] %s195
      %198 = dma.vmem_to_hbm [thread:$0]  %s196, 128, %s2, [#allocation4]
    $region25: #{tpu_custom_call.1} parent=1 // pred_fallthru
      _
    // Predicated region
    $region26: #{tpu_custom_call.1} parent=1 // pred_check
      _
    $region27: #{tpu_custom_call.1} parent=1 // pred_check_branch
      %200 = sbr.rel (0) target = $region29
    $region28: #{tpu_custom_call.1} parent=1 // pred_region
      %201 = dma.done [#allocation4], 128
    $region29: #{tpu_custom_call.1} parent=1 // pred_fallthru
      _
    %202 = vsyncpa [#allocation3], 1
    %203 = vsyncpa [#allocation6], 1
    %204 = vsyncpa [#allocation4], 1

</llo_original>
